<compile_context>
chip_gen: v6e
topology: v6e:2x2x1
jax: 0.10.0
libtpu: 0.0.40
codegen_flags: <defaults>
</compile_context>

<pallas_src>
import jax
import jax.numpy as jnp
from jax.experimental import pallas as pl
from jax.experimental.pallas import tpu as pltpu


# ---------------------------------------------------------------------------
# Kernel: one invocation, two fused block-diagonal matmuls, lane-dense output.
# ---------------------------------------------------------------------------
def _fused_mlp_kernel(x_ref, w_ref, b_ref, o_ref):
    # x_ref: (B, 4*D)        bf16   packed activations (branch-major columns)
    # w_ref: (4*D + 4*H, 4*H) bf16  rows [0:4D) = block-diag W1, rows [4D:) = block-diag W2
    # b_ref: (2, 4*H)        f32    row 0 = packed b1, row 1 = packed b2
    # o_ref: (B, 4*H)        f32    lane-dense output slab
    d4 = x_ref.shape[1]

    x = x_ref[...]
    w1 = w_ref[:d4, :]
    w2 = w_ref[d4:, :]

    # Layer 1: bf16 MXU matmul, f32 accumulate, f32 bias + ReLU.
    h = jnp.dot(x, w1, preferred_element_type=jnp.float32) + b_ref[0:1, :]
    h = jnp.maximum(h, 0.0)

    # Layer 2: cast hidden back to bf16 for the second MXU pass.
    h = h.astype(w_ref.dtype)
    y = jnp.dot(h, w2, preferred_element_type=jnp.float32) + b_ref[1:2, :]
    y = jnp.maximum(y, 0.0)

    o_ref[...] = y.astype(o_ref.dtype)


# ---------------------------------------------------------------------------
# Wrapper-side packing (done once; weights are static in the real module).
# ---------------------------------------------------------------------------
def _block_diag(blocks):
    n = len(blocks)
    rows = []
    for i, blk in enumerate(blocks):
        row = [blk if j == i else
               jnp.zeros((blk.shape[0], blocks[j].shape[1]), blk.dtype)
               for j in range(n)]
        rows.append(jnp.concatenate(row, axis=1))
    return jnp.concatenate(rows, axis=0)


def pack_params(w1, b1, w2, b2):
    """w1: (4, D, H), b1: (4, 1, H), w2: (4, H, H), b2: (4, 1, H).
    Returns w_all: (4D + 4H, 4H) bf16, b_all: (2, 4H) f32."""
    n, D, H = w1.shape
    w1_bd = _block_diag([w1[i] for i in range(n)])          # (4D, 4H)
    w2_bd = _block_diag([w2[i] for i in range(n)])          # (4H, 4H)
    w_all = jnp.concatenate([w1_bd, w2_bd], axis=0).astype(jnp.bfloat16)
    b_all = jnp.stack([b1.reshape(n * H), b2.reshape(n * H)],
                      axis=0).astype(jnp.float32)           # (2, 4H)
    return w_all, b_all


@jax.jit
def embed_landmark_forward(velocity, agent_gf, landmark_gf, wall_gf, w_all, b_all):
    """Returns (velocity_embed, agent_gf_embed, landmark_gf_embed, wall_gf_embed),
    each (B, H), matching the torch module's forward."""
    xs = jnp.stack([velocity, agent_gf, landmark_gf, wall_gf], axis=0)  # (4, B, D)
    n, B, D = xs.shape
    H4 = b_all.shape[1]
    H = H4 // n

    # Branch-major column packing: columns [b*D:(b+1)*D] belong to branch b.
    x_pack = jnp.transpose(xs, (1, 0, 2)).reshape(B, n * D).astype(jnp.bfloat16)

    out = pl.pallas_call(
        _fused_mlp_kernel,
        out_shape=jax.ShapeDtypeStruct((B, H4), jnp.float32),
        in_specs=[
            pl.BlockSpec(memory_space=pltpu.MemorySpace.VMEM),
            pl.BlockSpec(memory_space=pltpu.MemorySpace.VMEM),
            pl.BlockSpec(memory_space=pltpu.MemorySpace.VMEM),
        ],
        out_specs=pl.BlockSpec(memory_space=pltpu.MemorySpace.VMEM),
    )(x_pack, w_all, b_all)

    out = out.reshape(B, n, H).transpose(1, 0, 2)  # (4, B, H)
    return out[0], out[1], out[2], out[3]


# ---------------------------------------------------------------------------
# Reference / init for the self-test.
# ---------------------------------------------------------------------------
def init_params(key, input_dim, hidden_dim, n_branch=4):
    """Deterministic synthetic init, torch.nn.Linear-style uniform bounds."""
    keys = jax.random.split(key, 4)
    bound1 = 1.0 / (input_dim ** 0.5)
    bound2 = 1.0 / (hidden_dim ** 0.5)
    w1 = jax.random.uniform(keys[0], (n_branch, input_dim, hidden_dim),
                            jnp.float32, -bound1, bound1)
    b1 = jax.random.uniform(keys[1], (n_branch, 1, hidden_dim),
                            jnp.float32, -bound1, bound1)
    w2 = jax.random.uniform(keys[2], (n_branch, hidden_dim, hidden_dim),
                            jnp.float32, -bound2, bound2)
    b2 = jax.random.uniform(keys[3], (n_branch, 1, hidden_dim),
                            jnp.float32, -bound2, bound2)
    return w1, b1, w2, b2


def reference_forward(xs, w1, b1, w2, b2, emulate_bf16=False):
    if emulate_bf16:
        cast = lambda a: a.astype(jnp.bfloat16).astype(jnp.float32)
    else:
        cast = lambda a: a
    h = jnp.einsum("nbd,ndh->nbh", cast(xs), cast(w1),
                   precision=jax.lax.Precision.HIGHEST) + b1
    h = jnp.maximum(h, 0.0)
    y = jnp.einsum("nbh,nhk->nbk", cast(h), cast(w2),
                   precision=jax.lax.Precision.HIGHEST) + b2
    return jnp.maximum(y, 0.0)


if __name__ == "__main__":
    batch = 8
    input_dim = 16
    hidden_dim = 32

    key = jax.random.PRNGKey(0)
    k_x, k_p = jax.random.split(key)

    # velocity, agent_gf, landmark_gf, wall_gf each [batch, input_dim]
    velocity = jax.random.normal(jax.random.fold_in(k_x, 0), (batch, input_dim), jnp.float32)
    agent_gf = jax.random.normal(jax.random.fold_in(k_x, 1), (batch, input_dim), jnp.float32)
    landmark_gf = jax.random.normal(jax.random.fold_in(k_x, 2), (batch, input_dim), jnp.float32)
    wall_gf = jax.random.normal(jax.random.fold_in(k_x, 3), (batch, input_dim), jnp.float32)

    w1, b1, w2, b2 = init_params(k_p, input_dim, hidden_dim)
    w_all, b_all = pack_params(w1, b1, w2, b2)   # one-time static packing

    outs = embed_landmark_forward(velocity, agent_gf, landmark_gf, wall_gf, w_all, b_all)
    outs = jax.block_until_ready(outs)
    velocity_embed, agent_gf_embed, landmark_gf_embed, wall_gf_embed = outs

    xs = jnp.stack([velocity, agent_gf, landmark_gf, wall_gf], axis=0)
    got = jnp.stack(outs, axis=0)                               # (4, B, H)

    # Tight check against a reference using the same bf16-operand arithmetic.
    ref_bf16 = reference_forward(xs, w1, b1, w2, b2, emulate_bf16=True)
    assert got.shape == (4, batch, hidden_dim)
    assert jnp.allclose(got, ref_bf16, atol=1e-3, rtol=1e-3), \
        float(jnp.max(jnp.abs(got - ref_bf16)))

    # Loose sanity check against the pure-f32 reference (original torch semantics).
    ref_f32 = reference_forward(xs, w1, b1, w2, b2, emulate_bf16=False)
    assert jnp.allclose(got, ref_f32, atol=5e-2, rtol=5e-2)

    assert velocity_embed.shape == (batch, hidden_dim)
    print("KERNEL_OK")
</pallas_src>

<mosaic_0001>
module attributes {stable_mosaic.version = 11 : i64} {
  func.func @_fused_mlp_kernel(%arg0: memref<8x64xbf16, #tpu.memory_space<vmem>>, %arg1: memref<192x128xbf16, #tpu.memory_space<vmem>>, %arg2: memref<2x128xf32, #tpu.memory_space<vmem>>, %arg3: memref<8x128xf32, #tpu.memory_space<vmem>>) attributes {dimension_semantics = [], scalar_prefetch = 0 : i64, scratch_operands = 0 : i64, tpu.core_type = #tpu.core_type<tc>} {
    %c0 = arith.constant 0 : index
    %c0_0 = arith.constant 0 : index
    %0 = vector.load %arg0[%c0, %c0_0] : memref<8x64xbf16, #tpu.memory_space<vmem>>, vector<8x64xbf16>
    %c0_1 = arith.constant 0 : index
    %c0_2 = arith.constant 0 : index
    %1 = vector.load %arg1[%c0_1, %c0_2] : memref<192x128xbf16, #tpu.memory_space<vmem>>, vector<64x128xbf16>
    %c64 = arith.constant 64 : index
    %c0_3 = arith.constant 0 : index
    %2 = vector.load %arg1[%c64, %c0_3] : memref<192x128xbf16, #tpu.memory_space<vmem>>, vector<128x128xbf16>
    %cst = arith.constant dense<0.000000e+00> : vector<8x128xf32>
    %3 = tpu.matmul %0, %1, %cst {dimension_numbers = #tpu.dot_dimension_numbers<[1], [0], [0], [1], [0, 0, 1, 1], [], []>} : vector<8x64xbf16>, vector<64x128xbf16>, vector<8x128xf32> -> vector<8x128xf32>
    %c0_4 = arith.constant 0 : index
    %c0_5 = arith.constant 0 : index
    %4 = vector.load %arg2[%c0_4, %c0_5] : memref<2x128xf32, #tpu.memory_space<vmem>>, vector<1x128xf32>
    %5 = vector.broadcast %4 : vector<1x128xf32> to vector<8x128xf32>
    %6 = arith.addf %3, %5 : vector<8x128xf32>
    %cst_6 = arith.constant 0.000000e+00 : f32
    %7 = vector.broadcast %cst_6 : f32 to vector<8x128xf32>
    %8 = arith.maximumf %6, %7 : vector<8x128xf32>
    %9 = arith.truncf %8 : vector<8x128xf32> to vector<8x128xbf16>
    %cst_7 = arith.constant dense<0.000000e+00> : vector<8x128xf32>
    %10 = tpu.matmul %9, %2, %cst_7 {dimension_numbers = #tpu.dot_dimension_numbers<[1], [0], [0], [1], [0, 0, 1, 1], [], []>} : vector<8x128xbf16>, vector<128x128xbf16>, vector<8x128xf32> -> vector<8x128xf32>
    %c1 = arith.constant 1 : index
    %c0_8 = arith.constant 0 : index
    %11 = vector.load %arg2[%c1, %c0_8] : memref<2x128xf32, #tpu.memory_space<vmem>>, vector<1x128xf32>
    %12 = vector.broadcast %11 : vector<1x128xf32> to vector<8x128xf32>
    %13 = arith.addf %10, %12 : vector<8x128xf32>
    %cst_9 = arith.constant 0.000000e+00 : f32
    %14 = vector.broadcast %cst_9 : f32 to vector<8x128xf32>
    %15 = arith.maximumf %13, %14 : vector<8x128xf32>
    %c0_10 = arith.constant 0 : index
    %c0_11 = arith.constant 0 : index
    %16 = vector.load %arg3[%c0_10, %c0_11] : memref<8x128xf32, #tpu.memory_space<vmem>>, vector<8x128xf32>
    tpu.vector_store %arg3[%c0_10, %c0_11], %15 {strides = array<i32>} : memref<8x128xf32, #tpu.memory_space<vmem>>, vector<8x128xf32>,
    return
  }
}

</mosaic_0001>

<llo_original>
// kernel: embed_landmark_forward.1
$region0: #{embed_landmark_forward.1}
  #allocation0 [shape = 'u32[]', space=smem, size = 0x4, offset = 0x4, fixed_abs, tag = 'smem constant byte address 0x4 - core index']
  #allocation1 [shape = 'u32[144,128]{1,0:T(1,128)}', space=vmem, size = 0x12000, scoped, tag = 'internal scratch']
  %s0 = inlined_call_operand.vmem [shape: bf16[8,64], index: 0, kind: input, shape index: {}]
  %s1 = inlined_call_operand.vmem [shape: bf16[192,128], index: 1, kind: input, shape index: {}]
  %s2 = inlined_call_operand.vmem [shape: f32[2,128], index: 2, kind: input, shape index: {}]
  %s3 = inlined_call_operand.vmem [shape: f32[8,128], index: 3, kind: output, shape index: {}]
  %s4 = sld [smem:[#allocation0]]
  $region22: #{embed_landmark_forward.1} parent=0
    _
  %s6 = ssub.s32 1, %s4
  %s7 = scalar_select 0, %s6, %s4
  // Predicated region
  $region2: #{embed_landmark_forward.1} parent=0 // pred_check
    _
  $region3: #{embed_landmark_forward.1} parent=0 // pred_check_branch
    %9 = sbr.rel (0) target = $region5
  $region4: #{embed_landmark_forward.1} parent=0 // pred_region
    _
  $region5: #{embed_landmark_forward.1} parent=0 // pred_fallthru
    _
  // Predicated region
  $region6: #{embed_landmark_forward.1} parent=0 // pred_check
    _
  $region7: #{embed_landmark_forward.1} parent=0 // pred_check_branch
    %11 = sbr.rel (0) target = $region9
  $region8: #{embed_landmark_forward.1} parent=0 // pred_region
    _
  $region9: #{embed_landmark_forward.1} parent=0 // pred_fallthru
    _
  // Predicated region
  $region10: #{embed_landmark_forward.1} parent=0 // pred_check
    _
  $region11: #{embed_landmark_forward.1} parent=0 // pred_check_branch
    %13 = sbr.rel (0) target = $region13
  $region12: #{embed_landmark_forward.1} parent=0 // pred_region
    _
  $region13: #{embed_landmark_forward.1} parent=0 // pred_fallthru
    _
  %v15 = vld [vmem:[%s0] sm:$0xf]
  %v16 = vld [vmem:[%s1] sm:$0xf]
  %v17 = vld [vmem:[%s1 + $0x4] sm:$0xf]
  %v18 = vld [vmem:[%s1 + $0x8] sm:$0xf]
  %v19 = vld [vmem:[%s1 + $0xc] sm:$0xf]
  %v20 = vld [vmem:[%s1 + $0x10] sm:$0xf]
  %v21 = vld [vmem:[%s1 + $0x14] sm:$0xf]
  %v22 = vld [vmem:[%s1 + $0x18] sm:$0xf]
  %v23 = vld [vmem:[%s1 + $0x1c] sm:$0xf]
  %v24 = vld [vmem:[%s1 + $0x20] sm:$0xf]
  %v25 = vld [vmem:[%s1 + $0x24] sm:$0xf]
  %v26 = vld [vmem:[%s1 + $0x28] sm:$0xf]
  %v27 = vld [vmem:[%s1 + $0x2c] sm:$0xf]
  %v28 = vld [vmem:[%s1 + $0x30] sm:$0xf]
  %v29 = vld [vmem:[%s1 + $0x34] sm:$0xf]
  %v30 = vld [vmem:[%s1 + $0x38] sm:$0xf]
  %v31 = vld [vmem:[%s1 + $0x3c] sm:$0xf]
  %v32 = vld [vmem:[%s1 + $0x40] sm:$0xf]
  %v33 = vld [vmem:[%s1 + $0x44] sm:$0xf]
  %v34 = vld [vmem:[%s1 + $0x48] sm:$0xf]
  %v35 = vld [vmem:[%s1 + $0x4c] sm:$0xf]
  %v36 = vld [vmem:[%s1 + $0x50] sm:$0xf]
  %v37 = vld [vmem:[%s1 + $0x54] sm:$0xf]
  %v38 = vld [vmem:[%s1 + $0x58] sm:$0xf]
  %v39 = vld [vmem:[%s1 + $0x5c] sm:$0xf]
  %v40 = vld [vmem:[%s2] sm:$0x1]
  %v41 = vlaneseq
  %v42 = vshrl.u32 %v41, 7
  %v43 = vsub.s32 0, %v42
  %v44 = vrot.slane %v40, %v43
  %v53 = vunpack.c.l.b16 %v16
  %v54 = vunpack.c.l.b16 %v17
  %v55 = vunpack.c.l.b16 %v18
  %v56 = vunpack.c.l.b16 %v19
  %v57 = vunpack.c.l.b16 %v20
  %v58 = vunpack.c.l.b16 %v21
  %v59 = vunpack.c.l.b16 %v22
  %v60 = vunpack.c.l.b16 %v23
  %v61 = vpack.c.b16 %v54, %v53
  %v62 = vpack.c.b16 %v56, %v55
  %v63 = vpack.c.b16 %v58, %v57
  %v64 = vpack.c.b16 %v60, %v59
  %vm69 = vcmask 523264
  %v71 = vsel %vm69, %v15, 0
  %73 = vmatprep.subr.bf16.mxu0 0
  %74 = vmatpush1.bf16.msra.mxu0 0
  %75 = vmatprep.subr.bf16.mxu0 0
  %76 = vmatpush1.bf16.msra.mxu0 0
  %77 = vmatprep.subr.bf16.mxu0 0
  %78 = vmatpush1.bf16.msra.mxu0 0
  %79 = vmatprep.subr.bf16.mxu0 0
  %80 = vmatpush1.bf16.msra.mxu0 0
  %81 = vmatprep.subr.bf16.mxu0 0
  %82 = vmatpush1.bf16.msra.mxu0 %v64
  %83 = vmatprep.subr.bf16.mxu0 0
  %84 = vmatpush1.bf16.msra.mxu0 %v63
  %85 = vmatprep.subr.bf16.mxu0 0
  %86 = vmatpush1.bf16.msra.mxu0 %v62
  %87 = vmatprep.subr.bf16.mxu0 0
  %88 = vmatpush1.bf16.msra.mxu0 %v61
  %89 = vmatprep.subr.bf16.mxu0 0
  %90 = vmatpush2.bf16.msra.mxu0 0
  %91 = vmatprep.subr.bf16.mxu0 0
  %92 = vmatpush2.bf16.msra.mxu0 0
  %93 = vmatprep.subr.bf16.mxu0 0
  %94 = vmatpush2.bf16.msra.mxu0 0
  %95 = vmatprep.subr.bf16.mxu0 0
  %96 = vmatpush2.bf16.msra.mxu0 0
  %97 = vmatprep.subr.bf16.mxu0 0
  %98 = vmatpush2.bf16.msra.mxu0 0
  %99 = vmatprep.subr.bf16.mxu0 0
  %100 = vmatpush2.bf16.msra.mxu0 0
  %101 = vmatprep.subr.bf16.mxu0 0
  %102 = vmatpush2.bf16.msra.mxu0 0
  %103 = vmatprep.subr.bf16.mxu0 0
  %104 = vmatpush2.bf16.msra.mxu0 0
  %105 = vmatprep.mubr.bf16.mxu0 0
  %106 = vmatmul.mubr.bf16.gmra.mxu0 %v71
  %v107 = vpop.f32.mrf.mxu0
  %v108 = vadd.f32 %v44, %v107
  %v109 = vpop.f32.mrf.mxu0
  %v110 = vpop.f32.mrf.mxu0
  %v111 = vpop.f32.mrf.mxu0
  %112 = vdwg.mxu0
  %v113 = vmax.f32 %v108, 0.0
  %v114 = vpack.c.bf16 %v113, %v113
  %v115 = vld [vmem:[%s2 + $0x1] sm:$0x1]
  %v116 = vlaneseq
  %v117 = vshrl.u32 %v116, 7
  %v118 = vsub.s32 0, %v117
  %v119 = vrot.slane %v115, %v118
  %v136 = vunpack.c.l.b16 %v24
  %v137 = vunpack.c.l.b16 %v25
  %v138 = vunpack.c.l.b16 %v26
  %v139 = vunpack.c.l.b16 %v27
  %v140 = vunpack.c.l.b16 %v28
  %v141 = vunpack.c.l.b16 %v29
  %v142 = vunpack.c.l.b16 %v30
  %v143 = vunpack.c.l.b16 %v31
  %v144 = vunpack.c.l.b16 %v32
  %v145 = vunpack.c.l.b16 %v33
  %v146 = vunpack.c.l.b16 %v34
  %v147 = vunpack.c.l.b16 %v35
  %v148 = vunpack.c.l.b16 %v36
  %v149 = vunpack.c.l.b16 %v37
  %v150 = vunpack.c.l.b16 %v38
  %v151 = vunpack.c.l.b16 %v39
  %v152 = vpack.c.b16 %v137, %v136
  %v153 = vpack.c.b16 %v139, %v138
  %v154 = vpack.c.b16 %v141, %v140
  %v155 = vpack.c.b16 %v143, %v142
  %v156 = vpack.c.b16 %v145, %v144
  %v157 = vpack.c.b16 %v147, %v146
  %v158 = vpack.c.b16 %v149, %v148
  %v159 = vpack.c.b16 %v151, %v150
  %168 = vmatprep.subr.bf16.mxu0 0
  %169 = vmatpush1.bf16.msra.mxu0 %v159
  %170 = vmatprep.subr.bf16.mxu0 0
  %171 = vmatpush1.bf16.msra.mxu0 %v158
  %172 = vmatprep.subr.bf16.mxu0 0
  %173 = vmatpush1.bf16.msra.mxu0 %v157
  %174 = vmatprep.subr.bf16.mxu0 0
  %175 = vmatpush1.bf16.msra.mxu0 %v156
  %176 = vmatprep.subr.bf16.mxu0 0
  %177 = vmatpush1.bf16.msra.mxu0 %v155
  %178 = vmatprep.subr.bf16.mxu0 0
  %179 = vmatpush1.bf16.msra.mxu0 %v154
  %180 = vmatprep.subr.bf16.mxu0 0
  %181 = vmatpush1.bf16.msra.mxu0 %v153
  %182 = vmatprep.subr.bf16.mxu0 0
  %183 = vmatpush1.bf16.msra.mxu0 %v152
  %184 = vmatprep.subr.bf16.mxu0 0
  %185 = vmatpush2.bf16.msra.mxu0 0
  %186 = vmatprep.subr.bf16.mxu0 0
  %187 = vmatpush2.bf16.msra.mxu0 0
  %188 = vmatprep.subr.bf16.mxu0 0
  %189 = vmatpush2.bf16.msra.mxu0 0
  %190 = vmatprep.subr.bf16.mxu0 0
  %191 = vmatpush2.bf16.msra.mxu0 0
  %192 = vmatprep.subr.bf16.mxu0 0
  %193 = vmatpush2.bf16.msra.mxu0 0
  %194 = vmatprep.subr.bf16.mxu0 0
  %195 = vmatpush2.bf16.msra.mxu0 0
  %196 = vmatprep.subr.bf16.mxu0 0
  %197 = vmatpush2.bf16.msra.mxu0 0
  %198 = vmatprep.subr.bf16.mxu0 0
  %199 = vmatpush2.bf16.msra.mxu0 0
  %200 = vmatprep.mubr.bf16.mxu0 0
  %201 = vmatmul.mubr.bf16.gmra.mxu0 %v114
  %v202 = vpop.f32.mrf.mxu0
  %v203 = vadd.f32 %v119, %v202
  %v204 = vpop.f32.mrf.mxu0
  %v205 = vpop.f32.mrf.mxu0
  %v206 = vpop.f32.mrf.mxu0
  %207 = vdwg.mxu0
  %v208 = vmax.f32 %v203, 0.0
  %209 = vst [vmem:[%s3] sm:$0xff] %v208
  // Predicated region
  $region14: #{embed_landmark_forward.1} parent=0 // pred_check
    _
  $region15: #{embed_landmark_forward.1} parent=0 // pred_check_branch
    %211 = sbr.rel (0) target = $region17
  $region16: #{embed_landmark_forward.1} parent=0 // pred_region
    _
  $region17: #{embed_landmark_forward.1} parent=0 // pred_fallthru
    _
  // Predicated region
  $region18: #{embed_landmark_forward.1} parent=0 // pred_check
    _
  $region19: #{embed_landmark_forward.1} parent=0 // pred_check_branch
    %213 = sbr.rel (0) target = $region21
  $region20: #{embed_landmark_forward.1} parent=0 // pred_region
    _
  $region21: #{embed_landmark_forward.1} parent=0 // pred_fallthru
    _

</llo_original>
